<compile_context>
chip_gen: v5e
topology: v5e:2x2
jax: 0.10.0
libtpu: 0.0.40
codegen_flags: <defaults>
</compile_context>

<pallas_src>
import functools

import jax
import jax.numpy as jnp
from jax.experimental import pallas as pl
from jax.experimental.pallas import tpu as pltpu


def _round_up(x, m):
    return (x + m - 1) // m * m


def _cdiv(a, b):
    return (a + b - 1) // b


def _cnn_loop_kernel(x_ref, w_ref, b_ref, o_ref, *, c_in_p, k_size):
    # x_ref: (L*C_in_p, TILE)   rows ordered as (l, c) -> l*C_in_p + c
    # w_ref: (C_out, K*C_in_p)  cols ordered as (k, c) -> k*C_in_p + c
    # b_ref: (C_out, 1) f32 ; o_ref: (C_out, TILE)
    l_total = x_ref.shape[0] // c_in_p
    l_out = l_total - k_size + 1
    patch_rows = k_size * c_in_p

    w = w_ref[...]                       # constant-index block: VMEM-resident
    # Output position 0 initializes the running max (l_out >= 1 asserted).
    acc = jnp.dot(w, x_ref[0:patch_rows, :],
                  preferred_element_type=jnp.float32)
    for l in range(1, l_out):
        start = l * c_in_p               # static & sublane-aligned (C_in padded)
        acc = jnp.maximum(
            acc,
            jnp.dot(w, x_ref[start:start + patch_rows, :],
                    preferred_element_type=jnp.float32))
    # bias-add commutes with the running max; ReLU last.
    o_ref[...] = jnp.maximum(acc + b_ref[...], 0.0).astype(o_ref.dtype)


def _cnn_banded_kernel(x_ref, wb_ref, b_ref, o_ref, *, c_out_p, l_out):
    # x_ref : (L*C_in, TILE)
    # wb_ref: (l_out*C_out_p, L*C_in)  banded/Toeplitz weight
    # b_ref : (C_out_p, 1) f32 (zero-padded) ; o_ref: (C_out_p, TILE)
    y = jnp.dot(wb_ref[...], x_ref[...], preferred_element_type=jnp.float32)
    acc = y[0:c_out_p, :]
    for l in range(1, l_out):            # grouped max over l_out row blocks
        acc = jnp.maximum(acc, y[l * c_out_p:(l + 1) * c_out_p, :])
    o_ref[...] = jnp.maximum(acc + b_ref[...], 0.0).astype(o_ref.dtype)


def cnn_forward(x, w, b, *, tile_n=512, compute_dtype=jnp.bfloat16,
                force_loop=False, vmem_budget_bytes=12 * 1024 * 1024):
    """x: (S, B, C_in, L); w: (C_out, C_in, K); b: (C_out,) -> (S, B, C_out)."""
    S, B, c_in, L = x.shape
    c_out, _, k_size = w.shape
    l_out = L - k_size + 1
    assert l_out >= 1, "sequence length must be >= kernel_size"
    n_rows = S * B
    out_dtype = x.dtype
    in_itemsize = jnp.dtype(compute_dtype).itemsize
    out_itemsize = jnp.dtype(out_dtype).itemsize

    # Sublane granularity of the compute dtype (8 for f32, 16 for bf16): the
    # loop path's patch-slice starts must be multiples of this to stay a view.
    sublane = 32 // in_itemsize

    # Banded path when l_out*C_out_p fits one MXU row block (128 is the
    # conservative bound that holds on v5e as well as v6e/v7x).
    c_out_p = _round_up(c_out, 8)
    use_banded = (not force_loop) and (l_out * c_out_p <= 128)

    # Loop path slices x_ref at l*C_in_p -> pad C_in for aligned (free) slices.
    # Banded path never slices x in-kernel, so keep C_in unpadded (less HBM).
    c_in_p = c_in if use_banded else _round_up(c_in, sublane)
    x_rows = L * c_in_p
    if use_banded:
        w_rows, w_cols, out_rows = l_out * c_out_p, x_rows, c_out_p
    else:
        w_rows, w_cols, out_rows = c_out, k_size * c_in_p, c_out

    # ---- tile selection: balanced blocks (minimal padding), >= 2 blocks for
    # v7x's 2 TensorCores when possible, VMEM-budgeted (v5e 16 MiB default). ----
    num_blocks = max(1, _cdiv(n_rows, int(tile_n)))
    tile = _round_up(_cdiv(n_rows, num_blocks), 128)
    if num_blocks == 1 and n_rows > 128:
        tile = _round_up(_cdiv(n_rows, 2), 128)      # megacore: 2 blocks

    def vmem_bytes(t):
        return (2 * x_rows * t * in_itemsize         # double-buffered x tile
                + 2 * out_rows * t * out_itemsize    # double-buffered out tile
                + 2 * w_rows * w_cols * in_itemsize  # weights (conservative)
                + 4096)                              # bias + slack

    while tile > 128 and vmem_bytes(tile) > vmem_budget_bytes:
        tile -= 128

    n_pad = _round_up(n_rows, tile)
    grid = (n_pad // tile,)

    # ---- wrapper-side layout: cast to bf16 FIRST (half the transposed bytes),
    # fold the N and C_in pads into one producer, then a single transpose. ----
    xc = x.astype(compute_dtype).reshape(n_rows, c_in, L)
    xc = jnp.pad(xc, ((0, n_pad - n_rows), (0, c_in_p - c_in), (0, 0)))
    x_t = xc.transpose(2, 1, 0).reshape(x_rows, n_pad)   # rows: l*C_in_p + c

    wc = jnp.transpose(w.astype(compute_dtype), (0, 2, 1))   # (C_out, K, C_in)
    if use_banded:
        w_flat = wc.reshape(c_out, k_size * c_in)
        wb = jnp.zeros((w_rows, w_cols), compute_dtype)
        for l in range(l_out):        # built once in the wrapper; tiny
            wb = wb.at[l * c_out_p:l * c_out_p + c_out,
                       l * c_in:l * c_in + k_size * c_in].set(w_flat)
        w_arg = wb
        b_arg = jnp.pad(b.astype(jnp.float32).reshape(c_out, 1),
                        ((0, c_out_p - c_out), (0, 0)))
        kernel = functools.partial(_cnn_banded_kernel,
                                   c_out_p=c_out_p, l_out=l_out)
        flops = 2 * n_pad * w_rows * w_cols
    else:
        w_arg = jnp.pad(wc, ((0, 0), (0, 0),
                             (0, c_in_p - c_in))).reshape(c_out, w_cols)
        b_arg = b.astype(jnp.float32).reshape(c_out, 1)
        kernel = functools.partial(_cnn_loop_kernel,
                                   c_in_p=c_in_p, k_size=k_size)
        flops = 2 * n_pad * c_out * w_cols * l_out

    cost = pl.CostEstimate(
        flops=int(flops),
        transcendentals=0,
        bytes_accessed=int(x_t.size * in_itemsize + w_arg.size * in_itemsize
                           + b_arg.size * 4 + out_rows * n_pad * out_itemsize))

    out = pl.pallas_call(
        kernel,
        out_shape=jax.ShapeDtypeStruct((out_rows, n_pad), out_dtype),
        grid_spec=pltpu.PrefetchScalarGridSpec(
            num_scalar_prefetch=0,
            grid=grid,
            in_specs=[
                pl.BlockSpec((x_rows, tile), lambda i: (0, i)),
                pl.BlockSpec((w_rows, w_cols), lambda i: (0, 0)),
                pl.BlockSpec((out_rows, 1), lambda i: (0, 0)),
            ],
            out_specs=pl.BlockSpec((out_rows, tile), lambda i: (0, i)),
        ),
        compiler_params=pltpu.CompilerParams(
            dimension_semantics=("parallel",)),
        cost_estimate=cost,
    )(x_t, w_arg, b_arg)

    # (out_rows, N_pad) -> drop padding -> (N, C_out) -> (S, B, C_out)
    return out[:c_out, :n_rows].T.reshape(S, B, c_out)


def _reference(x, w, b):
    """Pure-JAX f32 reference matching PyTorch Conv1d+ReLU+AdaptiveMaxPool1d."""
    S, B, c_in, L = x.shape
    c_out, _, K = w.shape
    l_out = L - K + 1
    x_flat = x.reshape(S * B, c_in, L)
    acc = jnp.zeros((S * B, c_out, l_out), jnp.float32)
    for k in range(K):
        acc = acc + jnp.einsum("ncl,oc->nol", x_flat[:, :, k:k + l_out], w[:, :, k])
    acc = acc + b[None, :, None]
    acc = jnp.maximum(acc, 0.0)
    return jnp.max(acc, axis=-1).reshape(S, B, c_out)


if __name__ == "__main__":
    # Small shapes consistent with the module's forward (N = S*B = 192 rows).
    S, B = 6, 32          # sentence length, batch
    C_IN, C_OUT = 4, 8    # in_channels, out_channels
    L, K = 16, 3          # char sequence length, kernel_size

    key = jax.random.PRNGKey(0)
    kx, kw, kb = jax.random.split(key, 3)
    x = jax.random.normal(kx, (S, B, C_IN, L), dtype=jnp.float32)
    w = jax.random.normal(kw, (C_OUT, C_IN, K), dtype=jnp.float32) * 0.1
    b = jax.random.normal(kb, (C_OUT,), dtype=jnp.float32) * 0.1

    ref = _reference(x, w, b)

    # Banded single-matmul path (default): bf16 inputs, f32 accumulation.
    out_banded_bf16 = jax.block_until_ready(cnn_forward(x, w, b))
    # Same path with f32 compute for a tighter numerical check.
    out_banded_f32 = jax.block_until_ready(
        cnn_forward(x, w, b, compute_dtype=jnp.float32))
    # Per-position-matmul path (used for large C_out), both precisions;
    # tile_n=128 exercises the multi-block + row-padding logic there too.
    out_loop_bf16 = jax.block_until_ready(
        cnn_forward(x, w, b, force_loop=True, tile_n=128))
    out_loop_f32 = jax.block_until_ready(
        cnn_forward(x, w, b, force_loop=True, compute_dtype=jnp.float32))

    assert out_banded_bf16.shape == (S, B, C_OUT), out_banded_bf16.shape
    checks = [("banded/bf16", out_banded_bf16, 3e-2),
              ("banded/f32", out_banded_f32, 1e-2),
              ("loop/bf16", out_loop_bf16, 3e-2),
              ("loop/f32", out_loop_f32, 1e-2)]
    for name, out, tol in checks:
        if not jnp.allclose(out, ref, atol=tol, rtol=tol):
            raise AssertionError(f"Pallas output ({name}) does not match reference")

    print("KERNEL_OK")
</pallas_src>

<mosaic_0001>
module attributes {stable_mosaic.version = 11 : i64} {
  func.func @_cnn_banded_kernel(%arg0: i32, %arg1: memref<64x128xbf16, #tpu.memory_space<vmem>>, %arg2: memref<112x64xbf16, #tpu.memory_space<vmem>>, %arg3: memref<8x1xf32, #tpu.memory_space<vmem>>, %arg4: memref<8x128xf32, #tpu.memory_space<vmem>>) attributes {dimension_semantics = [#tpu.dimension_semantics<parallel>], iteration_bounds = array<i64: 2>, scalar_prefetch = 0 : i64, scratch_operands = 0 : i64, tpu.core_type = #tpu.core_type<tc>, window_params = [{transform_indices = @transform_0, window_bounds = array<i64: 64, 128>}, {pipeline_mode = #tpu.pipeline_mode<synchronous>, transform_indices = @transform_1, window_bounds = array<i64: 112, 64>}, {pipeline_mode = #tpu.pipeline_mode<synchronous>, transform_indices = @transform_2, window_bounds = array<i64: 8, 1>}, {transform_indices = @transform_3, window_bounds = array<i64: 8, 128>}]} {
    %c0 = arith.constant 0 : index
    %c0_0 = arith.constant 0 : index
    %0 = vector.load %arg2[%c0, %c0_0] : memref<112x64xbf16, #tpu.memory_space<vmem>>, vector<112x64xbf16>
    %c0_1 = arith.constant 0 : index
    %c0_2 = arith.constant 0 : index
    %1 = vector.load %arg1[%c0_1, %c0_2] : memref<64x128xbf16, #tpu.memory_space<vmem>>, vector<64x128xbf16>
    %cst = arith.constant dense<0.000000e+00> : vector<112x128xf32>
    %2 = tpu.matmul %0, %1, %cst {dimension_numbers = #tpu.dot_dimension_numbers<[1], [0], [0], [1], [0, 0, 1, 1], [], []>} : vector<112x64xbf16>, vector<64x128xbf16>, vector<112x128xf32> -> vector<112x128xf32>
    %3 = vector.extract_strided_slice %2 {offsets = [0, 0], sizes = [8, 128], strides = [1, 1]} : vector<112x128xf32> to vector<8x128xf32>
    %4 = vector.extract_strided_slice %2 {offsets = [8, 0], sizes = [8, 128], strides = [1, 1]} : vector<112x128xf32> to vector<8x128xf32>
    %5 = arith.maximumf %3, %4 : vector<8x128xf32>
    %6 = vector.extract_strided_slice %2 {offsets = [16, 0], sizes = [8, 128], strides = [1, 1]} : vector<112x128xf32> to vector<8x128xf32>
    %7 = arith.maximumf %5, %6 : vector<8x128xf32>
    %8 = vector.extract_strided_slice %2 {offsets = [24, 0], sizes = [8, 128], strides = [1, 1]} : vector<112x128xf32> to vector<8x128xf32>
    %9 = arith.maximumf %7, %8 : vector<8x128xf32>
    %10 = vector.extract_strided_slice %2 {offsets = [32, 0], sizes = [8, 128], strides = [1, 1]} : vector<112x128xf32> to vector<8x128xf32>
    %11 = arith.maximumf %9, %10 : vector<8x128xf32>
    %12 = vector.extract_strided_slice %2 {offsets = [40, 0], sizes = [8, 128], strides = [1, 1]} : vector<112x128xf32> to vector<8x128xf32>
    %13 = arith.maximumf %11, %12 : vector<8x128xf32>
    %14 = vector.extract_strided_slice %2 {offsets = [48, 0], sizes = [8, 128], strides = [1, 1]} : vector<112x128xf32> to vector<8x128xf32>
    %15 = arith.maximumf %13, %14 : vector<8x128xf32>
    %16 = vector.extract_strided_slice %2 {offsets = [56, 0], sizes = [8, 128], strides = [1, 1]} : vector<112x128xf32> to vector<8x128xf32>
    %17 = arith.maximumf %15, %16 : vector<8x128xf32>
    %18 = vector.extract_strided_slice %2 {offsets = [64, 0], sizes = [8, 128], strides = [1, 1]} : vector<112x128xf32> to vector<8x128xf32>
    %19 = arith.maximumf %17, %18 : vector<8x128xf32>
    %20 = vector.extract_strided_slice %2 {offsets = [72, 0], sizes = [8, 128], strides = [1, 1]} : vector<112x128xf32> to vector<8x128xf32>
    %21 = arith.maximumf %19, %20 : vector<8x128xf32>
    %22 = vector.extract_strided_slice %2 {offsets = [80, 0], sizes = [8, 128], strides = [1, 1]} : vector<112x128xf32> to vector<8x128xf32>
    %23 = arith.maximumf %21, %22 : vector<8x128xf32>
    %24 = vector.extract_strided_slice %2 {offsets = [88, 0], sizes = [8, 128], strides = [1, 1]} : vector<112x128xf32> to vector<8x128xf32>
    %25 = arith.maximumf %23, %24 : vector<8x128xf32>
    %26 = vector.extract_strided_slice %2 {offsets = [96, 0], sizes = [8, 128], strides = [1, 1]} : vector<112x128xf32> to vector<8x128xf32>
    %27 = arith.maximumf %25, %26 : vector<8x128xf32>
    %28 = vector.extract_strided_slice %2 {offsets = [104, 0], sizes = [8, 128], strides = [1, 1]} : vector<112x128xf32> to vector<8x128xf32>
    %29 = arith.maximumf %27, %28 : vector<8x128xf32>
    %c0_3 = arith.constant 0 : index
    %c0_4 = arith.constant 0 : index
    %30 = vector.load %arg3[%c0_3, %c0_4] : memref<8x1xf32, #tpu.memory_space<vmem>>, vector<8x1xf32>
    %31 = vector.broadcast %30 : vector<8x1xf32> to vector<8x128xf32>
    %32 = arith.addf %29, %31 : vector<8x128xf32>
    %cst_5 = arith.constant 0.000000e+00 : f32
    %33 = vector.broadcast %cst_5 : f32 to vector<8x128xf32>
    %34 = arith.maximumf %32, %33 : vector<8x128xf32>
    %c0_6 = arith.constant 0 : index
    %c0_7 = arith.constant 0 : index
    %35 = vector.load %arg4[%c0_6, %c0_7] : memref<8x128xf32, #tpu.memory_space<vmem>>, vector<8x128xf32>
    tpu.vector_store %arg4[%c0_6, %c0_7], %34 {strides = array<i32>} : memref<8x128xf32, #tpu.memory_space<vmem>>, vector<8x128xf32>,
    return
  }
  func.func @transform_0(%arg0: i32) -> (i32, i32) {
    %c0_i32 = arith.constant 0 : i32
    %c0_i32_0 = arith.constant 0 : i32
    return %c0_i32, %arg0 : i32, i32
  }
  func.func @transform_1(%arg0: i32) -> (i32, i32) {
    %c0_i32 = arith.constant 0 : i32
    %c0_i32_0 = arith.constant 0 : i32
    %c0_i32_1 = arith.constant 0 : i32
    return %c0_i32, %c0_i32_0 : i32, i32
  }
  func.func @transform_2(%arg0: i32) -> (i32, i32) {
    %c0_i32 = arith.constant 0 : i32
    %c0_i32_0 = arith.constant 0 : i32
    %c0_i32_1 = arith.constant 0 : i32
    return %c0_i32, %c0_i32_0 : i32, i32
  }
  func.func @transform_3(%arg0: i32) -> (i32, i32) {
    %c0_i32 = arith.constant 0 : i32
    %c0_i32_0 = arith.constant 0 : i32
    return %c0_i32, %arg0 : i32, i32
  }
}

</mosaic_0001>

<llo_original>
// kernel: tpu_custom_call.1
$region0: #{tpu_custom_call.1}
  #allocation0 [shape = 'u32[]', space=smem, size = 0x4, offset = 0x4, fixed_abs, tag = 'smem constant byte address 0x4 - core index']
  #allocation1 [shape = 'u32[72,128]{1,0:T(1,128)}', space=vmem, size = 0x9000, scoped, tag = 'internal scratch']
  %s0 = inlined_call_operand.vmem [shape: bf16[64,256], index: 0, kind: input, shape index: {}]
  %s1 = inlined_call_operand.vmem [shape: bf16[112,64], index: 1, kind: input, shape index: {}]
  %s2 = inlined_call_operand.vmem [shape: f32[8,1], index: 2, kind: input, shape index: {}]
  %s3 = inlined_call_operand.hbm [shape: f32[8,256], index: 3, kind: output, shape index: {}]
  %s4 = sld [smem:[#allocation0]]
  $region86: #{tpu_custom_call.1} parent=0
    _
  %s6 = ssub.s32 1, %s4
  %s7 = scalar_select 0, %s6, %s4
  $region1: #{tpu_custom_call.1} parent=0
    #allocation2 [shape = 'u8[32768]{0}', space=vmem, size = 0x8000, scoped, tag = 'input window, operand 0']
    #allocation3 [shape = 'u8[8192]{0}', space=vmem, size = 0x2000, scoped, tag = 'output window, operand 0']
    #allocation4 [shape = 's32[2]{0}', space=sflag, size = 0x8, scoped, tag = 'scoped memory for tpu_custom_call.1']
    %8 = vsyncpa [#allocation4], 0
    %s9 = scalar_lea.sflag [#allocation4], 1
    %10 = vsyncpa %s9, 0
    loop: start=0, step=1, limit=4
    $region2: #{tpu_custom_call.1} parent=1 // loop_pre_header
      _
    $region3: #{tpu_custom_call.1} parent=1 // loop_header
      %s12 = sphi 0, %s16
      %p13 = scmp.ge.s32.totalorder %s12, 4
      %s22 = sphi 0, %s24
      %s25 = sphi 0, %s22
      %s26 = sphi 0, %s25
      %s42 = sphi 0, %s26
      %s46 = sphi 0, %s46
      %s48 = sphi 0, %s46
      %s49 = sphi 0, %s48
      %s63 = sphi 0, %s49
      %s67 = sphi 0, %s67
      %s69 = sphi 0, %s67
      %s70 = sphi 0, %s69
      %s84 = sphi 0, %s70
      %s90 = sphi 0, %s92
      %s93 = sphi 0, %s90
      %s94 = sphi 0, %s93
      %s110 = sphi 0, %s94
    $region4: #{tpu_custom_call.1} parent=1 // loop_header_branch
      %15 = sbr.rel (%p13) target = $region8
    $region5: #{tpu_custom_call.1} parent=1 // loop_body
      %s17 = ssub.s32 %s12, 1
      %s18 = ssub.s32 %s12, 2
      %s19 = sadd.s32 %s12, 1
      %s20 = ssub.s32 %s12, %s19
      %p21 = scmp.eq.s32.totalorder %s20, 0
      %s23 = sadd.s32 %s22, 1
      %s24 = scalar_select %p21, %s22, %s23
      %p27 = pneg %p21
      %p28 = scmp.eq.s32.totalorder %s12, 1
      %p29 = por %p27, %p28
      %p30 = scmp.ne.s32.totalorder %s22, %s25
      %p31 = scmp.eq.s32.totalorder %s12, 0
      %p32 = por %p30, %p31
      %p33 = scmp.ne.s32.totalorder %s22, %s25
      %p34 = scmp.eq.s32.totalorder %s17, 1
      %p35 = por %p33, %p34
      %p36 = scmp.ne.s32.totalorder %s25, %s26
      %p37 = scmp.eq.s32.totalorder %s17, 0
      %p38 = por %p36, %p37
      %p39 = scmp.ne.s32.totalorder %s25, %s26
      %p40 = scmp.eq.s32.totalorder %s18, 1
      %p41 = por %p39, %p40
      %p43 = scmp.ne.s32.totalorder %s26, %s42
      %p44 = scmp.eq.s32.totalorder %s18, 0
      %p45 = por %p43, %p44
      %s47 = sadd.s32 %s46, 1
      %p50 = scmp.eq.s32.totalorder %s12, 1
      %p51 = scmp.ne.s32.totalorder %s46, %s48
      %p52 = scmp.eq.s32.totalorder %s12, 0
      %p53 = por %p51, %p52
      %p54 = scmp.ne.s32.totalorder %s46, %s48
      %p55 = scmp.eq.s32.totalorder %s17, 1
      %p56 = por %p54, %p55
      %p57 = scmp.ne.s32.totalorder %s48, %s49
      %p58 = scmp.eq.s32.totalorder %s17, 0
      %p59 = por %p57, %p58
      %p60 = scmp.ne.s32.totalorder %s48, %s49
      %p61 = scmp.eq.s32.totalorder %s18, 1
      %p62 = por %p60, %p61
      %p64 = scmp.ne.s32.totalorder %s49, %s63
      %p65 = scmp.eq.s32.totalorder %s18, 0
      %p66 = por %p64, %p65
      %s68 = sadd.s32 %s67, 1
      %p71 = scmp.eq.s32.totalorder %s12, 1
      %p72 = scmp.ne.s32.totalorder %s67, %s69
      %p73 = scmp.eq.s32.totalorder %s12, 0
      %p74 = por %p72, %p73
      %p75 = scmp.ne.s32.totalorder %s67, %s69
      %p76 = scmp.eq.s32.totalorder %s17, 1
      %p77 = por %p75, %p76
      %p78 = scmp.ne.s32.totalorder %s69, %s70
      %p79 = scmp.eq.s32.totalorder %s17, 0
      %p80 = por %p78, %p79
      %p81 = scmp.ne.s32.totalorder %s69, %s70
      %p82 = scmp.eq.s32.totalorder %s18, 1
      %p83 = por %p81, %p82
      %p85 = scmp.ne.s32.totalorder %s70, %s84
      %p86 = scmp.eq.s32.totalorder %s18, 0
      %p87 = por %p85, %p86
      %s88 = ssub.s32 %s12, %s19
      %p89 = scmp.eq.s32.totalorder %s88, 0
      %s91 = sadd.s32 %s90, 1
      %s92 = scalar_select %p89, %s90, %s91
      %p95 = pneg %p89
      %p96 = scmp.eq.s32.totalorder %s12, 1
      %p97 = por %p95, %p96
      %p98 = scmp.ne.s32.totalorder %s90, %s93
      %p99 = scmp.eq.s32.totalorder %s12, 0
      %p100 = por %p98, %p99
      %p101 = scmp.ne.s32.totalorder %s90, %s93
      %p102 = scmp.eq.s32.totalorder %s17, 1
      %p103 = por %p101, %p102
      %p104 = scmp.ne.s32.totalorder %s93, %s94
      %p105 = scmp.eq.s32.totalorder %s17, 0
      %p106 = por %p104, %p105
      %p107 = scmp.ne.s32.totalorder %s93, %s94
      %p108 = scmp.eq.s32.totalorder %s18, 1
      %p109 = por %p107, %p108
      %p111 = scmp.ne.s32.totalorder %s94, %s110
      %p112 = scmp.eq.s32.totalorder %s18, 0
      %p113 = por %p111, %p112
      %p114 = scmp.le.s32.totalorder 1, %s12
      %p115 = scmp.lt.s32.totalorder %s12, 3
      %p116 = pnand %p114, %p115
      %p117 = pneg %p116
      // Predicated region
      $region9: #{tpu_custom_call.1} parent=5 // pred_check
        _
      $region10: #{tpu_custom_call.1} parent=5 // pred_check_branch
        %119 = sbr.rel (%p116) target = $region12
      $region11: #{tpu_custom_call.1} parent=5 // pred_region
        %s120 = ssub.s32 %s12, 1
        // Predicated region
        $region13: #{tpu_custom_call.1} parent=11 // pred_check
          %p121 = pneg %p59
        $region14: #{tpu_custom_call.1} parent=11 // pred_check_branch
          %123 = sbr.rel (%p121) target = $region16
        $region15: #{tpu_custom_call.1} parent=11 // pred_region
          _
        $region16: #{tpu_custom_call.1} parent=11 // pred_fallthru
          _
        // Predicated region
        $region17: #{tpu_custom_call.1} parent=11 // pred_check
          %p124 = pneg %p80
        $region18: #{tpu_custom_call.1} parent=11 // pred_check_branch
          %126 = sbr.rel (%p124) target = $region20
        $region19: #{tpu_custom_call.1} parent=11 // pred_region
          _
        $region20: #{tpu_custom_call.1} parent=11 // pred_fallthru
          _
      $region12: #{tpu_custom_call.1} parent=5 // pred_fallthru
        _
      %p127 = scmp.lt.s32.totalorder %s12, 2
      // Predicated region
      $region21: #{tpu_custom_call.1} parent=5 // pred_check
        %p128 = pneg %p127
      $region22: #{tpu_custom_call.1} parent=5 // pred_check_branch
        %130 = sbr.rel (%p128) target = $region24
      $region23: #{tpu_custom_call.1} parent=5 // pred_region
        // Predicated region
        $region25: #{tpu_custom_call.1} parent=23 // pred_check
          %p131 = pneg %p32
        $region26: #{tpu_custom_call.1} parent=23 // pred_check_branch
          %133 = sbr.rel (%p131) target = $region28
        $region27: #{tpu_custom_call.1} parent=23 // pred_region
          %s134 = sand.u32 %s22, 1
          %s135 = sand.u32 %s22, 1
          %s136 = smul.addr %s135, 32
          %s137 = scalar_lea.vmem [#allocation2], %s136
          %s138 = smul.addr %s12, 4
          %s139 = scalar_lea.vmem %s0, %s138
          // Predicated region
          $region29: #{tpu_custom_call.1} parent=27 // pred_check
            _
          $region30: #{tpu_custom_call.1} parent=27 // pred_check_branch
            %141 = sbr.rel (0) target = $region32
          $region31: #{tpu_custom_call.1} parent=27 // pred_region
            // Predicated region
            $region33: #{tpu_custom_call.1} parent=31 // pred_check
              _
            $region34: #{tpu_custom_call.1} parent=31 // pred_check_branch
              %143 = sbr.rel target = $region36
            $region35: #{tpu_custom_call.1} parent=31 // pred_region
              // Predicated region
              $region48: #{tpu_custom_call.1} parent=35 // pred_check
                _
              $region49: #{tpu_custom_call.1} parent=35 // pred_check_branch
                %173 = sbr.rel (0) target = $region51
              $region50: #{tpu_custom_call.1} parent=35 // pred_region
                loop: start=0, step=1, limit=1
                $region52: #{tpu_custom_call.1} parent=50 // loop_pre_header
                  _
                $region53: #{tpu_custom_call.1} parent=50 // loop_header
                  %s175 = sphi 0, %s179
                  %p176 = scmp.ge.s32.totalorder %s175, 1
                  %s180 = sphi %s139, %s139
                  %s181 = sphi %s137, %s137
                $region54: #{tpu_custom_call.1} parent=50 // loop_header_branch
                  %178 = sbr.rel (%p176) target = $region58
                $region55: #{tpu_custom_call.1} parent=50 // loop_body
                  _
                $region56: #{tpu_custom_call.1} parent=50 // loop_footer
                  %s179 = sadd.s32 1, %s175
                $region57: #{tpu_custom_call.1} parent=50 // loop_footer_branch
                  %174 = sbr.rel target = $region53
                $region58: #{tpu_custom_call.1} parent=50 // loop_exit
                  _
                %s183 = ssub.s32 16, 1
                loop: start=0, step=1, limit=1
                $region59: #{tpu_custom_call.1} parent=50 // loop_pre_header
                  _
                $region60: #{tpu_custom_call.1} parent=50 // loop_header
                  %s185 = sphi 0, %s189
                  %p186 = scmp.ge.s32.totalorder %s185, 1
                  %s190 = sphi %s139, %s139
                  %s191 = sphi %s137, %s137
                $region61: #{tpu_custom_call.1} parent=50 // loop_header_branch
                  %188 = sbr.rel (%p186) target = $region65
                $region62: #{tpu_custom_call.1} parent=50 // loop_body
                  %v192 = vld [vmem:[%s190] sm:%s183]
                  %193 = vst [vmem:[%s191] sm:%s183] %v192
                  %v194 = vld [vmem:[%s190 + $0x8] sm:%s183]
                  %195 = vst [vmem:[%s191 + $0x4] sm:%s183] %v194
                  %v196 = vld [vmem:[%s190 + $0x10] sm:%s183]
                  %197 = vst [vmem:[%s191 + $0x8] sm:%s183] %v196
                  %v198 = vld [vmem:[%s190 + $0x18] sm:%s183]
                  %199 = vst [vmem:[%s191 + $0xc] sm:%s183] %v198
                  %v200 = vld [vmem:[%s190 + $0x20] sm:%s183]
                  %201 = vst [vmem:[%s191 + $0x10] sm:%s183] %v200
                  %v202 = vld [vmem:[%s190 + $0x28] sm:%s183]
                  %203 = vst [vmem:[%s191 + $0x14] sm:%s183] %v202
                  %v204 = vld [vmem:[%s190 + $0x30] sm:%s183]
                  %205 = vst [vmem:[%s191 + $0x18] sm:%s183] %v204
                  %v206 = vld [vmem:[%s190 + $0x38] sm:%s183]
                  %207 = vst [vmem:[%s191 + $0x1c] sm:%s183] %v206
                $region63: #{tpu_custom_call.1} parent=50 // loop_footer
                  %s189 = sadd.s32 1, %s185
                $region64: #{tpu_custom_call.1} parent=50 // loop_footer_branch
                  %184 = sbr.rel target = $region60
                $region65: #{tpu_custom_call.1} parent=50 // loop_exit
                  _
              $region51: #{tpu_custom_call.1} parent=35 // pred_fallthru
                _
            $region36: #{tpu_custom_call.1} parent=31 // pred_fallthru
              _
            // Predicated region
            $region37: #{tpu_custom_call.1} parent=31 // pred_check
              _
            $region38: #{tpu_custom_call.1} parent=31 // pred_check_branch
              %145 = sbr.rel (0) target = $region40
            $region39: #{tpu_custom_call.1} parent=31 // pred_region
              %s147 = ssub.s32 16, 1
              loop: start=0, step=1, limit=1
              $region41: #{tpu_custom_call.1} parent=39 // loop_pre_header
                _
              $region42: #{tpu_custom_call.1} parent=39 // loop_header
                %s149 = sphi 0, %s153
                %p150 = scmp.ge.s32.totalorder %s149, 1
                %s154 = sphi %s139, %s139
                %s155 = sphi %s137, %s137
              $region43: #{tpu_custom_call.1} parent=39 // loop_header_branch
                %152 = sbr.rel (%p150) target = $region47
              $region44: #{tpu_custom_call.1} parent=39 // loop_body
                %v156 = vld [vmem:[%s154] sm:%s147]
                %157 = vst [vmem:[%s155] sm:%s147] %v156
                %v158 = vld [vmem:[%s154 + $0x8] sm:%s147]
                %159 = vst [vmem:[%s155 + $0x4] sm:%s147] %v158
                %v160 = vld [vmem:[%s154 + $0x10] sm:%s147]
                %161 = vst [vmem:[%s155 + $0x8] sm:%s147] %v160
                %v162 = vld [vmem:[%s154 + $0x18] sm:%s147]
                %163 = vst [vmem:[%s155 + $0xc] sm:%s147] %v162
                %v164 = vld [vmem:[%s154 + $0x20] sm:%s147]
                %165 = vst [vmem:[%s155 + $0x10] sm:%s147] %v164
                %v166 = vld [vmem:[%s154 + $0x28] sm:%s147]
                %167 = vst [vmem:[%s155 + $0x14] sm:%s147] %v166
                %v168 = vld [vmem:[%s154 + $0x30] sm:%s147]
                %169 = vst [vmem:[%s155 + $0x18] sm:%s147] %v168
                %v170 = vld [vmem:[%s154 + $0x38] sm:%s147]
                %171 = vst [vmem:[%s155 + $0x1c] sm:%s147] %v170
              $region45: #{tpu_custom_call.1} parent=39 // loop_footer
                %s153 = sadd.s32 1, %s149
              $region46: #{tpu_custom_call.1} parent=39 // loop_footer_branch
                %148 = sbr.rel target = $region42
              $region47: #{tpu_custom_call.1} parent=39 // loop_exit
                _
            $region40: #{tpu_custom_call.1} parent=31 // pred_fallthru
              _
          $region32: #{tpu_custom_call.1} parent=27 // pred_fallthru
            _
          %208 = vnop
        $region28: #{tpu_custom_call.1} parent=23 // pred_fallthru
          _
      $region24: #{tpu_custom_call.1} parent=5 // pred_fallthru
        _
      %p209 = scmp.le.s32.totalorder 1, %s12
      %p210 = scmp.lt.s32.totalorder %s12, 3
      %p211 = pnand %p209, %p210
      %p212 = pneg %p211
      // Predicated region
      $region66: #{tpu_custom_call.1} parent=5 // pred_check
        _
      $region67: #{tpu_custom_call.1} parent=5 // pred_check_branch
        %214 = sbr.rel (%p211) target = $region69
      $region68: #{tpu_custom_call.1} parent=5 // pred_region
        %s215 = ssub.s32 %s12, 1
        %s216 = sand.u32 %s25, 1
        %s217 = sand.u32 %s25, 1
        %s218 = smul.addr %s217, 32
        %s219 = scalar_lea.vmem [#allocation2], %s218
        // Predicated region
        $region70: #{tpu_custom_call.1} parent=68 // pred_check
          %p220 = pneg %p38
        $region71: #{tpu_custom_call.1} parent=68 // pred_check_branch
          %222 = sbr.rel (%p220) target = $region73
        $region72: #{tpu_custom_call.1} parent=68 // pred_region
          _
        $region73: #{tpu_custom_call.1} parent=68 // pred_fallthru
          _
        %s223 = sand.u32 %s25, 1
        %s224 = sand.u32 %s25, 1
        %s225 = smul.addr %s224, 32
        %s226 = scalar_lea.vmem [#allocation2], %s225
        %p227 = pneg %p38
        %p228 = pneg %p35
        %p229 = pneg %p59
        %p230 = pneg %p56
        %p231 = pneg %p80
        %p232 = pneg %p77
        %p233 = pneg %p106
        %p234 = pneg %p103
        %s235 = sand.u32 %s93, 1
        %s236 = scalar_lea.sflag [#allocation4], %s235
        %s237 = sand.u32 %s93, 1
        %s238 = smul.addr %s237, 8
        %s239 = scalar_lea.vmem [#allocation3], %s238
        %v241 = vld [vmem:[%s1] sm:$0xf]
        %v242 = vld [vmem:[%s1 + $0x4] sm:$0xf]
        %v243 = vld [vmem:[%s1 + $0x8] sm:$0xf]
        %v244 = vld [vmem:[%s1 + $0xc] sm:$0xf]
        %v245 = vld [vmem:[%s1 + $0x10] sm:$0xf]
        %v246 = vld [vmem:[%s1 + $0x14] sm:$0xf]
        %v247 = vld [vmem:[%s1 + $0x18] sm:$0xf]
        %v248 = vld [vmem:[%s1 + $0x1c] sm:$0xf]
        %v249 = vld [vmem:[%s1 + $0x20] sm:$0xf]
        %v250 = vld [vmem:[%s1 + $0x24] sm:$0xf]
        %v251 = vld [vmem:[%s1 + $0x28] sm:$0xf]
        %v252 = vld [vmem:[%s1 + $0x2c] sm:$0xf]
        %v253 = vld [vmem:[%s1 + $0x30] sm:$0xf]
        %v254 = vld [vmem:[%s1 + $0x34] sm:$0xf]
        %v255 = vld [vmem:[%s219] sm:$0xf]
        %v256 = vld [vmem:[%s219 + $0x4] sm:$0xf]
        %v257 = vld [vmem:[%s219 + $0x8] sm:$0xf]
        %v258 = vld [vmem:[%s219 + $0xc] sm:$0xf]
        %v259 = vld [vmem:[%s219 + $0x10] sm:$0xf]
        %v260 = vld [vmem:[%s219 + $0x14] sm:$0xf]
        %v261 = vld [vmem:[%s219 + $0x18] sm:$0xf]
        %v262 = vld [vmem:[%s219 + $0x1c] sm:$0xf]
        %v277 = vunpack.c.l.b16 %v241
        %v278 = vunpack.c.l.b16 %v242
        %v279 = vunpack.c.l.b16 %v243
        %v280 = vunpack.c.l.b16 %v244
        %v281 = vunpack.c.l.b16 %v245
        %v282 = vunpack.c.l.b16 %v246
        %v283 = vunpack.c.l.b16 %v247
        %v284 = vunpack.c.l.b16 %v248
        %v285 = vunpack.c.l.b16 %v249
        %v286 = vunpack.c.l.b16 %v250
        %v287 = vunpack.c.l.b16 %v251
        %v288 = vunpack.c.l.b16 %v252
        %v289 = vunpack.c.l.b16 %v253
        %v290 = vunpack.c.l.b16 %v254
        %v291 = vpack.c.b16 %v278, %v277
        %v292 = vpack.c.b16 %v280, %v279
        %v293 = vpack.c.b16 %v282, %v281
        %v294 = vpack.c.b16 %v284, %v283
        %v295 = vpack.c.b16 %v286, %v285
        %v296 = vpack.c.b16 %v288, %v287
        %v297 = vpack.c.b16 %v290, %v289
        %v306 = vunpack.c.l.b16 %v255
        %v307 = vunpack.c.l.b16 %v256
        %v308 = vunpack.c.l.b16 %v257
        %v309 = vunpack.c.l.b16 %v258
        %v310 = vunpack.c.l.b16 %v259
        %v311 = vunpack.c.l.b16 %v260
        %v312 = vunpack.c.l.b16 %v261
        %v313 = vunpack.c.l.b16 %v262
        %v314 = vpack.c.b16 %v307, %v306
        %v315 = vpack.c.b16 %v309, %v308
        %v316 = vpack.c.b16 %v311, %v310
        %v317 = vpack.c.b16 %v313, %v312
        %vm322 = vcmask 523264
        %v324 = vsel %vm322, %v291, 0
        %v327 = vsel %vm322, %v292, 0
        %v330 = vsel %vm322, %v293, 0
        %v333 = vsel %vm322, %v294, 0
        %v336 = vsel %vm322, %v295, 0
        %v339 = vsel %vm322, %v296, 0
        %v342 = vsel %vm322, %v297, 0
        %344 = vmatpush.bf16.msra.mxu0 0
        %345 = vmatpush.bf16.msra.mxu0 0
        %346 = vmatpush.bf16.msra.mxu0 0
        %347 = vmatpush.bf16.msra.mxu0 0
        %348 = vmatpush.bf16.msra.mxu0 %v317
        %349 = vmatpush.bf16.msra.mxu0 %v316
        %350 = vmatpush.bf16.msra.mxu0 %v315
        %351 = vmatpush.bf16.msra.mxu0 %v314
        %352 = vmatmul.bf16.gmra.mxu0 %v324
        %v353 = vpop.f32.mrf.mxu0
        %v354 = vadd.f32 0.0, %v353
        %v355 = vpop.f32.mrf.mxu0
        %v356 = vadd.f32 0.0, %v355
        %357 = vmatmul.bf16.gmra.mxu0 %v327
        %v358 = vpop.f32.mrf.mxu0
        %v359 = vadd.f32 0.0, %v358
        %v360 = vpop.f32.mrf.mxu0
        %v361 = vadd.f32 0.0, %v360
        %362 = vmatmul.bf16.gmra.mxu0 %v330
        %v363 = vpop.f32.mrf.mxu0
        %v364 = vadd.f32 0.0, %v363
        %v365 = vpop.f32.mrf.mxu0
        %v366 = vadd.f32 0.0, %v365
        %367 = vmatmul.bf16.gmra.mxu0 %v333
        %v368 = vpop.f32.mrf.mxu0
        %v369 = vadd.f32 0.0, %v368
        %v370 = vpop.f32.mrf.mxu0
        %v371 = vadd.f32 0.0, %v370
        %372 = vmatmul.bf16.gmra.mxu0 %v336
        %v373 = vpop.f32.mrf.mxu0
        %v374 = vadd.f32 0.0, %v373
        %v375 = vpop.f32.mrf.mxu0
        %v376 = vadd.f32 0.0, %v375
        %377 = vmatmul.bf16.gmra.mxu0 %v339
        %v378 = vpop.f32.mrf.mxu0
        %v379 = vadd.f32 0.0, %v378
        %v380 = vpop.f32.mrf.mxu0
        %v381 = vadd.f32 0.0, %v380
        %382 = vmatmul.bf16.gmra.mxu0 %v342
        %v383 = vpop.f32.mrf.mxu0
        %v384 = vadd.f32 0.0, %v383
        %v385 = vpop.f32.mrf.mxu0
        %v386 = vadd.f32 0.0, %v385
        %387 = vdwg.mxu0
        %v388 = vmax.f32 %v354, %v356
        %v389 = vmax.f32 %v388, %v359
        %v390 = vmax.f32 %v389, %v361
        %v391 = vmax.f32 %v390, %v364
        %v392 = vmax.f32 %v391, %v366
        %v393 = vmax.f32 %v392, %v369
        %v394 = vmax.f32 %v393, %v371
        %v395 = vmax.f32 %v394, %v374
        %v396 = vmax.f32 %v395, %v376
        %v397 = vmax.f32 %v396, %v379
        %v398 = vmax.f32 %v397, %v381
        %v399 = vmax.f32 %v398, %v384
        %v400 = vmax.f32 %v399, %v386
        %v401 = vld [vmem:[%s2] sm:$0xff]
        %403 = vset.pattern.permute.xlu0 0
        %404 = vperm.xlu0 %403, %v401
        %v405 = vpop.permute.xlu0 %404
        %v407 = vadd.f32 %v400, %v405
        %v408 = vmax.f32 %v407, 0.0
        %409 = vst [vmem:[%s239] sm:$0xff] %v408
        %s410 = sand.u32 %s93, 1
        %s411 = scalar_lea.sflag [#allocation4], %s410
        %s412 = sand.u32 %s93, 1
        %s413 = smul.addr %s412, 8
        %s414 = scalar_lea.vmem [#allocation3], %s413
        // Predicated region
        $region74: #{tpu_custom_call.1} parent=68 // pred_check
          %p415 = pneg %p103
        $region75: #{tpu_custom_call.1} parent=68 // pred_check_branch
          %417 = sbr.rel (%p415) target = $region77
        $region76: #{tpu_custom_call.1} parent=68 // pred_region
          %419 = vsyncadd %s411, 0
          %s420 = smul.addr %s17, 8
          %s421 = scalar_lea.hbm %s3, %s420
          %s423 = sshll.u32 %s414, 4
          %s424 = int_to_ptr.vmem [resolvable:$true] %s423
          %s425 = sshll.u32 %s421, 4
          %s426 = int_to_ptr.hbm [resolvable:$true] %s425
          %428 = dma.vmem_to_hbm [thread:$0]  %s424, 128, %s426, %s411
        $region77: #{tpu_custom_call.1} parent=68 // pred_fallthru
          _
      $region69: #{tpu_custom_call.1} parent=5 // pred_fallthru
        _
      %p429 = scmp.le.s32.totalorder 2, %s12
      // Predicated region
      $region78: #{tpu_custom_call.1} parent=5 // pred_check
        %p430 = pneg %p429
      $region79: #{tpu_custom_call.1} parent=5 // pred_check_branch
        %432 = sbr.rel (%p430) target = $region81
      $region80: #{tpu_custom_call.1} parent=5 // pred_region
        %s433 = ssub.s32 %s12, 2
        // Predicated region
        $region82: #{tpu_custom_call.1} parent=80 // pred_check
          %p434 = pneg %p109
        $region83: #{tpu_custom_call.1} parent=80 // pred_check_branch
          %436 = sbr.rel (%p434) target = $region85
        $region84: #{tpu_custom_call.1} parent=80 // pred_region
          %s437 = sand.u32 %s94, 1
          %s438 = scalar_lea.sflag [#allocation4], %s437
          %s439 = sand.u32 %s94, 1
          %s440 = smul.addr %s439, 8
          %s441 = scalar_lea.vmem [#allocation3], %s440
          %443 = dma.done %s438, 128
        $region85: #{tpu_custom_call.1} parent=80 // pred_fallthru
          _
      $region81: #{tpu_custom_call.1} parent=5 // pred_fallthru
        _
    $region6: #{tpu_custom_call.1} parent=1 // loop_footer
      %s16 = sadd.s32 1, %s12
    $region7: #{tpu_custom_call.1} parent=1 // loop_footer_branch
      %11 = sbr.rel target = $region3
    $region8: #{tpu_custom_call.1} parent=1 // loop_exit
      _
    %444 = vsyncpa [#allocation4], 1
    %s445 = scalar_lea.sflag [#allocation4], 1
    %446 = vsyncpa %s445, 1

</llo_original>
